<compile_context>
chip_gen: v5e
topology: v5e:2x2
jax: 0.10.0
libtpu: 0.0.40
codegen_flags: <defaults>
</compile_context>

<pallas_src>
import functools
import math

import jax
import jax.numpy as jnp
from jax.experimental import pallas as pl
from jax.experimental.pallas import tpu as pltpu

_EULER_GAMMA = 0.577215664901532
_LANES = 128  # lane width; Fout is padded to this for lane-dense stores


def _vmem_spec():
    return pl.BlockSpec(memory_space=pltpu.MemorySpace.VMEM)


def _pad_cols(a, target):
    pad = target - a.shape[-1]
    if pad <= 0:
        return a
    return jnp.pad(a, [(0, 0)] * (a.ndim - 1) + [(0, pad)])


def _pad_out(fout):
    return max(_LANES, ((fout + _LANES - 1) // _LANES) * _LANES)


# ----------------------------- Pallas kernels ------------------------------

def _gcn_kernel(mask_ref, adj_ref, x_ref, w_ref, b_ref, o_ref):
    # adj_lay = mask * adj_normt   (mul_type == 'norm_first')
    adj_lay = (mask_ref[...] * adj_ref[...]).astype(jnp.bfloat16)
    support = jnp.dot(x_ref[...].astype(jnp.bfloat16),
                      w_ref[...].astype(jnp.bfloat16),
                      preferred_element_type=jnp.float32)
    out = jnp.dot(adj_lay, support.astype(jnp.bfloat16),
                  preferred_element_type=jnp.float32) + b_ref[...]
    o_ref[...] = jnp.maximum(out, 0.0)


def gcn_layer(mask_mat, adj_normt, x, w, b):
    """First layer: relu((mask*adj) @ (x @ W) + b). Output lane-padded to 128."""
    n, _ = x.shape
    fout = w.shape[1]
    fpad = _pad_out(fout)
    w_p = _pad_cols(w, fpad)
    b_p = _pad_cols(b.reshape(1, fout), fpad)
    out = pl.pallas_call(
        _gcn_kernel,
        out_shape=jax.ShapeDtypeStruct((n, fpad), jnp.float32),
        in_specs=[_vmem_spec()] * 5,
        out_specs=_vmem_spec(),
    )(mask_mat, adj_normt, x, w_p, b_p)
    return out[:, :fout]


def _block_gcn_kernel(mask_ref, adj_ref, xb_ref, w_ref, bsum_ref, o_ref, acc_ref):
    j = pl.program_id(0)

    @pl.when(j == 0)
    def _():
        acc_ref[...] = jnp.zeros_like(acc_ref)

    adj_lay = (mask_ref[0] * adj_ref[...]).astype(jnp.bfloat16)
    support = jnp.dot(xb_ref[0].astype(jnp.bfloat16),
                      w_ref[0].astype(jnp.bfloat16),
                      preferred_element_type=jnp.float32)
    acc_ref[...] += jnp.dot(adj_lay, support.astype(jnp.bfloat16),
                            preferred_element_type=jnp.float32)

    @pl.when(j == pl.num_programs(0) - 1)
    def _():
        # Reference sums full per-block GCN outputs (bias added per block);
        # Σ_j b_j is pre-summed in the wrapper and added once here. ReLU after
        # summing over blocks, then single unmasked store of the padded output.
        o_ref[...] = jnp.maximum(acc_ref[...] + bsum_ref[...], 0.0)


def block_gcn_layer(mask_blocks, adj_normt, x_blocks, w_blocks, b_sum):
    # mask_blocks: (nblock, N, N)   x_blocks: (nblock, N, fp)
    # w_blocks:    (nblock, fp, F)  b_sum:    (F,)   == Σ_j b_j
    nblock, n, _ = mask_blocks.shape
    fp = x_blocks.shape[-1]
    fout = w_blocks.shape[-1]
    fpad = _pad_out(fout)
    w_p = _pad_cols(w_blocks, fpad)                  # (nblock, fp, fpad)
    b_p = _pad_cols(b_sum.reshape(1, fout), fpad)    # (1, fpad)
    out = pl.pallas_call(
        _block_gcn_kernel,
        out_shape=jax.ShapeDtypeStruct((n, fpad), jnp.float32),
        grid=(nblock,),
        in_specs=[
            pl.BlockSpec((1, n, n), lambda j: (j, 0, 0)),
            pl.BlockSpec((n, n), lambda j: (0, 0)),
            pl.BlockSpec((1, n, fp), lambda j: (j, 0, 0)),
            pl.BlockSpec((1, fp, fpad), lambda j: (j, 0, 0)),
            pl.BlockSpec((1, fpad), lambda j: (0, 0)),
        ],
        out_specs=pl.BlockSpec((n, fpad), lambda j: (0, 0)),
        scratch_shapes=[pltpu.VMEM((n, fpad), jnp.float32)],
        compiler_params=pltpu.CompilerParams(dimension_semantics=("arbitrary",)),
    )(mask_blocks, adj_normt, x_blocks, w_p, b_p)
    return out[:, :fout]


def _final_kernel(mask_ref, adj_ref, x_ref, w_ref, b_ref, h_ref, recon_ref, *,
                  head_pad):
    # Fused mu/logvar layer (W concatenated along output axis) + inner-product
    # decoder: shared (mask*adj) stream and a single MXU pass over both heads.
    adj_lay = (mask_ref[...] * adj_ref[...]).astype(jnp.bfloat16)
    support = jnp.dot(x_ref[...].astype(jnp.bfloat16),
                      w_ref[...].astype(jnp.bfloat16),
                      preferred_element_type=jnp.float32)
    h = jnp.dot(adj_lay, support.astype(jnp.bfloat16),
                preferred_element_type=jnp.float32) + b_ref[...]
    # Reference applies F.relu to both mu and logvar.
    h = jnp.maximum(h, 0.0)
    h_ref[...] = h
    # Decoder on z = mu (eval mode). Padded mu columns are exactly zero, so the
    # contraction over the padded feature axis equals mu @ mu.T. Contract on
    # axis 1 of both operands (no transpose needed).
    mu_pad = h[:, :head_pad].astype(jnp.bfloat16)
    logits = jax.lax.dot_general(
        mu_pad, mu_pad,
        dimension_numbers=(((1,), (1,)), ((), ())),
        preferred_element_type=jnp.float32)
    recon_ref[...] = jax.nn.sigmoid(logits)


def final_layer_and_decode(mask_mat, adj_normt, xin, w_mu, b_mu, w_lv, b_lv):
    n, _ = xin.shape
    fout = w_mu.shape[1]
    hpad = _pad_out(fout)
    w_cat = jnp.concatenate([_pad_cols(w_mu, hpad), _pad_cols(w_lv, hpad)], axis=1)
    b_cat = jnp.concatenate([_pad_cols(b_mu.reshape(1, -1), hpad),
                             _pad_cols(b_lv.reshape(1, -1), hpad)], axis=1)
    h, recon = pl.pallas_call(
        functools.partial(_final_kernel, head_pad=hpad),
        out_shape=(jax.ShapeDtypeStruct((n, 2 * hpad), jnp.float32),
                   jax.ShapeDtypeStruct((n, n), jnp.float32)),
        in_specs=[_vmem_spec()] * 5,
        out_specs=(_vmem_spec(), _vmem_spec()),
    )(mask_mat, adj_normt, xin, w_cat, b_cat)
    mu = h[:, :fout]
    logvar = h[:, hpad:hpad + fout]
    return mu, logvar, recon


# --------------------------- BBGDC helpers (glue) ---------------------------

def bbgdc_get_params(a_uc, b_uc):
    a = jax.nn.softplus(jnp.clip(a_uc, -10.0, None))
    b = jax.nn.softplus(jnp.clip(b_uc, -10.0, 50.0))
    return a, b


def bbgdc_sample_pi(key, a_uc, b_uc):
    a, b = bbgdc_get_params(a_uc, b_uc)
    u = jnp.clip(jax.random.uniform(key, a_uc.shape), 1e-6, 1.0 - 1e-6)
    return (1.0 - u ** (1.0 / b)) ** (1.0 / a)


def bbgdc_get_weight(key, a_uc, b_uc, num_samps, temp=0.67):
    # RelaxedBernoulli(temp, probs=pi).rsample([num_samps]); torch clamps probs
    # inside probs_to_logits, mirror that to avoid +-inf logits.
    k_pi, k_z = jax.random.split(key)
    pi = bbgdc_sample_pi(k_pi, a_uc, b_uc)
    pi_c = jnp.clip(pi, 1e-6, 1.0 - 1e-6)
    logits = jnp.log(pi_c) - jnp.log1p(-pi_c)
    u = jnp.clip(jax.random.uniform(k_z, (num_samps,) + pi.shape), 1e-6, 1.0 - 1e-6)
    noise = jnp.log(u) - jnp.log1p(-u)
    z = jax.nn.sigmoid((logits + noise) / temp)
    return jnp.squeeze(z), pi


def bbgdc_get_reg(a_uc, b_uc, alpha=0.8, kl_scale=1.0):
    a, b = bbgdc_get_params(a_uc, b_uc)
    kld = ((1.0 - alpha / a) * (-_EULER_GAMMA - jax.scipy.special.digamma(b) - 1.0 / b)
           + jnp.log(a * b + 1e-10) - math.log(alpha) - (b - 1.0) / b)
    return kl_scale * kld.sum()


# ------------------------------ VBGAE wrapper -------------------------------

def init_vbgae_params(key, nfeat_list, nlay, nblock):
    keys = jax.random.split(key, 64)
    kidx = [0]

    def nk():
        k = keys[kidx[0]]
        kidx[0] += 1
        return k

    def gcn_init(fin, fout):
        stdv = 1.0 / math.sqrt(fout)
        w = jax.random.uniform(nk(), (fin, fout), minval=-stdv, maxval=stdv,
                               dtype=jnp.float32)
        b = jax.random.uniform(nk(), (fout,), minval=-stdv, maxval=stdv,
                               dtype=jnp.float32)
        return {"w": w, "b": b}

    def bbgdc_init():
        a_uc = jax.random.uniform(nk(), (1,), minval=1.0, maxval=1.5, dtype=jnp.float32)
        b_uc = jax.random.uniform(nk(), (1,), minval=0.49, maxval=0.51, dtype=jnp.float32)
        return {"a_uc": a_uc, "b_uc": b_uc}

    params = {"drpcons": [], "gcs": {}}
    idx = 0
    for i in range(nlay - 1):
        if i == 0:
            params["drpcons"].append(bbgdc_init())
            params["gcs"][str(idx)] = gcn_init(nfeat_list[i], nfeat_list[i + 1])
            idx += 1
        elif i < nlay - 2:
            params["drpcons"].append(bbgdc_init())
            for _ in range(nblock):
                params["gcs"][str(idx)] = gcn_init(nfeat_list[i] // nblock,
                                                   nfeat_list[i + 1])
                idx += 1
        else:
            params["drpcons"].append(bbgdc_init())
            params["gcs"][str(idx)] = gcn_init(nfeat_list[i], nfeat_list[i + 1])
            params["drpcons"].append(bbgdc_init())
            params["gcs"][str(idx + 1)] = gcn_init(nfeat_list[i], nfeat_list[i + 1])
            idx += 2
    return params


def vbgae_forward(params, key, x, adj_normt, nfeat_list, nlay, nblock, graph_size,
                  warm_up=1):
    # TODO(synk): eval-mode forward (training=False): F.dropout is identity and
    #             z = mu; training-mode torch RNG dropout / reparam noise omitted.
    num_edges = graph_size ** 2
    num_nodes = graph_size
    kld_loss = 0.0
    drop_rates = []
    mu = 0.0
    logvar = 0.0
    recon = None
    keys = jax.random.split(key, nlay)

    for i in range(nlay - 1):
        dp = params["drpcons"][i]
        mask_vec, drop_prob = bbgdc_get_weight(keys[i], dp["a_uc"], dp["b_uc"],
                                               nblock * num_edges)
        drop_rates.append(drop_prob)

        if i == 0:
            mask_mat = mask_vec[:num_edges].reshape(num_nodes, num_nodes)
            g = params["gcs"][str(i)]
            x = gcn_layer(mask_mat, adj_normt, x, g["w"], g["b"])
        elif i < nlay - 2:
            feat_pblock = nfeat_list[i] // nblock
            mask_blocks = mask_vec[:nblock * num_edges].reshape(
                nblock, num_nodes, num_nodes)
            x_blocks = x.reshape(num_nodes, nblock, feat_pblock).transpose(1, 0, 2)
            w_blocks = jnp.stack(
                [params["gcs"][str((i - 1) * nblock + j + 1)]["w"]
                 for j in range(nblock)])
            b_sum = sum(params["gcs"][str((i - 1) * nblock + j + 1)]["b"]
                        for j in range(nblock))
            x = block_gcn_layer(mask_blocks, adj_normt, x_blocks, w_blocks, b_sum)
        else:
            # In the reference, mu/logvar are recomputed (overwritten) for every
            # block j; only j == nblock-1 survives. Fused mu+logvar+decoder call.
            j = nblock - 1
            mask_mat = mask_vec[j * num_edges:(j + 1) * num_edges].reshape(
                num_nodes, num_nodes)
            g_mu = params["gcs"][str((i - 1) * nblock + 1)]
            g_lv = params["gcs"][str(i * nblock)]
            xin = x[:, :nfeat_list[i]]
            mu, logvar, recon = final_layer_and_decode(
                mask_mat, adj_normt, xin, g_mu["w"], g_mu["b"], g_lv["w"], g_lv["b"])

        kld_loss = kld_loss + bbgdc_get_reg(dp["a_uc"], dp["b_uc"])

    z = mu  # eval mode
    kld_loss = warm_up * kld_loss
    drop_rates = jnp.stack(drop_rates)
    z = z[None]
    mu = mu[None]
    recon = recon[None]
    return recon, z, mu, logvar, kld_loss, drop_rates


# ----------------------------------- main -----------------------------------

if __name__ == "__main__":
    key = jax.random.PRNGKey(0)
    k_param, k_x, k_adj, k_fwd = jax.random.split(key, 4)

    graph_size = 16            # num_nodes; num_edges = 256
    nlay, nblock = 4, 2
    nfeat_list = [32, 16, 16, 8]

    params = init_vbgae_params(k_param, nfeat_list, nlay, nblock)

    x = jax.random.normal(k_x, (graph_size, nfeat_list[0]), dtype=jnp.float32)

    # Build a symmetric, self-looped, symmetrically normalized adjacency
    # (plays the role of the precomputed `adj_normt` input).
    a = (jax.random.uniform(k_adj, (graph_size, graph_size)) > 0.7).astype(jnp.float32)
    a = jnp.minimum(jnp.maximum(a, a.T) + jnp.eye(graph_size, dtype=jnp.float32), 1.0)
    dinv = 1.0 / jnp.sqrt(a.sum(axis=1))
    adj_normt = a * dinv[:, None] * dinv[None, :]

    fwd = jax.jit(functools.partial(
        vbgae_forward, nfeat_list=tuple(nfeat_list), nlay=nlay, nblock=nblock,
        graph_size=graph_size))

    recon, z, mu, logvar, kld_loss, drop_rates = fwd(params, k_fwd, x, adj_normt)

    jax.block_until_ready((recon, z, mu, logvar, kld_loss, drop_rates))

    assert recon.shape == (1, graph_size, graph_size)
    assert z.shape == (1, graph_size, nfeat_list[-1])
    assert mu.shape == (1, graph_size, nfeat_list[-1])
    assert logvar.shape == (graph_size, nfeat_list[-1])
    assert drop_rates.shape == (nlay - 1, 1)
    assert bool(jnp.all(jnp.isfinite(recon)))
    print("KERNEL_OK")
</pallas_src>

<mosaic_0001>
module attributes {stable_mosaic.version = 11 : i64} {
  func.func @_gcn_kernel(%arg0: memref<16x16xf32, #tpu.memory_space<vmem>>, %arg1: memref<16x16xf32, #tpu.memory_space<vmem>>, %arg2: memref<16x32xf32, #tpu.memory_space<vmem>>, %arg3: memref<32x128xf32, #tpu.memory_space<vmem>>, %arg4: memref<1x128xf32, #tpu.memory_space<vmem>>, %arg5: memref<16x128xf32, #tpu.memory_space<vmem>>) attributes {dimension_semantics = [], scalar_prefetch = 0 : i64, scratch_operands = 0 : i64, tpu.core_type = #tpu.core_type<tc>} {
    %c0 = arith.constant 0 : index
    %c0_0 = arith.constant 0 : index
    %0 = vector.load %arg0[%c0, %c0_0] : memref<16x16xf32, #tpu.memory_space<vmem>>, vector<16x16xf32>
    %c0_1 = arith.constant 0 : index
    %c0_2 = arith.constant 0 : index
    %1 = vector.load %arg1[%c0_1, %c0_2] : memref<16x16xf32, #tpu.memory_space<vmem>>, vector<16x16xf32>
    %2 = arith.mulf %0, %1 : vector<16x16xf32>
    %3 = arith.truncf %2 : vector<16x16xf32> to vector<16x16xbf16>
    %c0_3 = arith.constant 0 : index
    %c0_4 = arith.constant 0 : index
    %4 = vector.load %arg2[%c0_3, %c0_4] : memref<16x32xf32, #tpu.memory_space<vmem>>, vector<16x32xf32>
    %5 = arith.truncf %4 : vector<16x32xf32> to vector<16x32xbf16>
    %c0_5 = arith.constant 0 : index
    %c0_6 = arith.constant 0 : index
    %6 = vector.load %arg3[%c0_5, %c0_6] : memref<32x128xf32, #tpu.memory_space<vmem>>, vector<32x128xf32>
    %7 = arith.truncf %6 : vector<32x128xf32> to vector<32x128xbf16>
    %cst = arith.constant dense<0.000000e+00> : vector<16x128xf32>
    %8 = tpu.matmul %5, %7, %cst {dimension_numbers = #tpu.dot_dimension_numbers<[1], [0], [0], [1], [0, 0, 1, 1], [], []>} : vector<16x32xbf16>, vector<32x128xbf16>, vector<16x128xf32> -> vector<16x128xf32>
    %9 = arith.truncf %8 : vector<16x128xf32> to vector<16x128xbf16>
    %cst_7 = arith.constant dense<0.000000e+00> : vector<16x128xf32>
    %10 = tpu.matmul %3, %9, %cst_7 {dimension_numbers = #tpu.dot_dimension_numbers<[1], [0], [0], [1], [0, 0, 1, 1], [], []>} : vector<16x16xbf16>, vector<16x128xbf16>, vector<16x128xf32> -> vector<16x128xf32>
    %c0_8 = arith.constant 0 : index
    %c0_9 = arith.constant 0 : index
    %11 = vector.load %arg4[%c0_8, %c0_9] : memref<1x128xf32, #tpu.memory_space<vmem>>, vector<1x128xf32>
    %12 = vector.broadcast %11 : vector<1x128xf32> to vector<16x128xf32>
    %13 = arith.addf %10, %12 : vector<16x128xf32>
    %cst_10 = arith.constant 0.000000e+00 : f32
    %14 = vector.broadcast %cst_10 : f32 to vector<16x128xf32>
    %15 = arith.maximumf %13, %14 : vector<16x128xf32>
    %c0_11 = arith.constant 0 : index
    %c0_12 = arith.constant 0 : index
    %16 = vector.load %arg5[%c0_11, %c0_12] : memref<16x128xf32, #tpu.memory_space<vmem>>, vector<16x128xf32>
    tpu.vector_store %arg5[%c0_11, %c0_12], %15 {strides = array<i32>} : memref<16x128xf32, #tpu.memory_space<vmem>>, vector<16x128xf32>,
    return
  }
}

module attributes {stable_mosaic.version = 11 : i64} {
  func.func @_block_gcn_kernel(%arg0: i32, %arg1: memref<1x16x16xf32, #tpu.memory_space<vmem>>, %arg2: memref<16x16xf32, #tpu.memory_space<vmem>>, %arg3: memref<1x16x8xf32, #tpu.memory_space<vmem>>, %arg4: memref<1x8x128xf32, #tpu.memory_space<vmem>>, %arg5: memref<1x128xf32, #tpu.memory_space<vmem>>, %arg6: memref<16x128xf32, #tpu.memory_space<vmem>>, %arg7: memref<16x128xf32, #tpu.memory_space<vmem>>) attributes {dimension_semantics = [#tpu.dimension_semantics<arbitrary>], iteration_bounds = array<i64: 2>, scalar_prefetch = 0 : i64, scratch_operands = 1 : i64, tpu.core_type = #tpu.core_type<tc>, window_params = [{transform_indices = @transform_0, window_bounds = array<i64: 1, 16, 16>}, {pipeline_mode = #tpu.pipeline_mode<synchronous>, transform_indices = @transform_1, window_bounds = array<i64: 16, 16>}, {transform_indices = @transform_2, window_bounds = array<i64: 1, 16, 8>}, {transform_indices = @transform_3, window_bounds = array<i64: 1, 8, 128>}, {pipeline_mode = #tpu.pipeline_mode<synchronous>, transform_indices = @transform_4, window_bounds = array<i64: 1, 128>}, {pipeline_mode = #tpu.pipeline_mode<synchronous>, transform_indices = @transform_5, window_bounds = array<i64: 16, 128>}]} {
    %c0_i32 = arith.constant 0 : i32
    %0 = arith.cmpi eq, %arg0, %c0_i32 : i32
    %1 = arith.extui %0 : i1 to i32
    %c0_i32_0 = arith.constant 0 : i32
    %2 = arith.cmpi ne, %1, %c0_i32_0 : i32
    scf.if %2 {
      %cst_17 = arith.constant 0.000000e+00 : f32
      %23 = vector.broadcast %cst_17 : f32 to vector<16x128xf32>
      %c0_18 = arith.constant 0 : index
      %c0_19 = arith.constant 0 : index
      %24 = vector.load %arg7[%c0_18, %c0_19] : memref<16x128xf32, #tpu.memory_space<vmem>>, vector<16x128xf32>
      tpu.vector_store %arg7[%c0_18, %c0_19], %23 {strides = array<i32>} : memref<16x128xf32, #tpu.memory_space<vmem>>, vector<16x128xf32>,
    } else {
    }
    %c0 = arith.constant 0 : index
    %c0_1 = arith.constant 0 : index
    %c0_2 = arith.constant 0 : index
    %3 = vector.load %arg1[%c0, %c0_1, %c0_2] : memref<1x16x16xf32, #tpu.memory_space<vmem>>, vector<1x16x16xf32>
    %4 = vector.shape_cast %3 : vector<1x16x16xf32> to vector<16x16xf32>
    %c0_3 = arith.constant 0 : index
    %c0_4 = arith.constant 0 : index
    %5 = vector.load %arg2[%c0_3, %c0_4] : memref<16x16xf32, #tpu.memory_space<vmem>>, vector<16x16xf32>
    %6 = arith.mulf %4, %5 : vector<16x16xf32>
    %7 = arith.truncf %6 : vector<16x16xf32> to vector<16x16xbf16>
    %c0_5 = arith.constant 0 : index
    %c0_6 = arith.constant 0 : index
    %c0_7 = arith.constant 0 : index
    %8 = vector.load %arg3[%c0_5, %c0_6, %c0_7] : memref<1x16x8xf32, #tpu.memory_space<vmem>>, vector<1x16x8xf32>
    %9 = vector.shape_cast %8 : vector<1x16x8xf32> to vector<16x8xf32>
    %10 = arith.truncf %9 : vector<16x8xf32> to vector<16x8xbf16>
    %c0_8 = arith.constant 0 : index
    %c0_9 = arith.constant 0 : index
    %c0_10 = arith.constant 0 : index
    %11 = vector.load %arg4[%c0_8, %c0_9, %c0_10] : memref<1x8x128xf32, #tpu.memory_space<vmem>>, vector<1x8x128xf32>
    %12 = vector.shape_cast %11 : vector<1x8x128xf32> to vector<8x128xf32>
    %13 = arith.truncf %12 : vector<8x128xf32> to vector<8x128xbf16>
    %cst = arith.constant dense<0.000000e+00> : vector<16x128xf32>
    %14 = tpu.matmul %10, %13, %cst {dimension_numbers = #tpu.dot_dimension_numbers<[1], [0], [0], [1], [0, 0, 1, 1], [], []>} : vector<16x8xbf16>, vector<8x128xbf16>, vector<16x128xf32> -> vector<16x128xf32>
    %c0_11 = arith.constant 0 : index
    %c0_12 = arith.constant 0 : index
    %15 = vector.load %arg7[%c0_11, %c0_12] : memref<16x128xf32, #tpu.memory_space<vmem>>, vector<16x128xf32>
    %16 = arith.truncf %14 : vector<16x128xf32> to vector<16x128xbf16>
    %cst_13 = arith.constant dense<0.000000e+00> : vector<16x128xf32>
    %17 = tpu.matmul %7, %16, %cst_13 {dimension_numbers = #tpu.dot_dimension_numbers<[1], [0], [0], [1], [0, 0, 1, 1], [], []>} : vector<16x16xbf16>, vector<16x128xbf16>, vector<16x128xf32> -> vector<16x128xf32>
    %18 = arith.addf %15, %17 : vector<16x128xf32>
    %c0_14 = arith.constant 0 : index
    %c0_15 = arith.constant 0 : index
    %19 = vector.load %arg7[%c0_14, %c0_15] : memref<16x128xf32, #tpu.memory_space<vmem>>, vector<16x128xf32>
    tpu.vector_store %arg7[%c0_14, %c0_15], %18 {strides = array<i32>} : memref<16x128xf32, #tpu.memory_space<vmem>>, vector<16x128xf32>,
    %c1_i32 = arith.constant 1 : i32
    %20 = arith.cmpi eq, %arg0, %c1_i32 : i32
    %21 = arith.extui %20 : i1 to i32
    %c0_i32_16 = arith.constant 0 : i32
    %22 = arith.cmpi ne, %21, %c0_i32_16 : i32
    scf.if %22 {
      %c0_17 = arith.constant 0 : index
      %c0_18 = arith.constant 0 : index
      %23 = vector.load %arg7[%c0_17, %c0_18] : memref<16x128xf32, #tpu.memory_space<vmem>>, vector<16x128xf32>
      %c0_19 = arith.constant 0 : index
      %c0_20 = arith.constant 0 : index
      %24 = vector.load %arg5[%c0_19, %c0_20] : memref<1x128xf32, #tpu.memory_space<vmem>>, vector<1x128xf32>
      %25 = vector.broadcast %24 : vector<1x128xf32> to vector<16x128xf32>
      %26 = arith.addf %23, %25 : vector<16x128xf32>
      %cst_21 = arith.constant 0.000000e+00 : f32
      %27 = vector.broadcast %cst_21 : f32 to vector<16x128xf32>
      %28 = arith.maximumf %26, %27 : vector<16x128xf32>
      %c0_22 = arith.constant 0 : index
      %c0_23 = arith.constant 0 : index
      %29 = vector.load %arg6[%c0_22, %c0_23] : memref<16x128xf32, #tpu.memory_space<vmem>>, vector<16x128xf32>
      tpu.vector_store %arg6[%c0_22, %c0_23], %28 {strides = array<i32>} : memref<16x128xf32, #tpu.memory_space<vmem>>, vector<16x128xf32>,
    } else {
    }
    return
  }
  func.func @transform_0(%arg0: i32) -> (i32, i32, i32) {
    %c0_i32 = arith.constant 0 : i32
    %c0_i32_0 = arith.constant 0 : i32
    %c0_i32_1 = arith.constant 0 : i32
    return %arg0, %c0_i32, %c0_i32_0 : i32, i32, i32
  }
  func.func @transform_1(%arg0: i32) -> (i32, i32) {
    %c0_i32 = arith.constant 0 : i32
    %c0_i32_0 = arith.constant 0 : i32
    %c0_i32_1 = arith.constant 0 : i32
    return %c0_i32, %c0_i32_0 : i32, i32
  }
  func.func @transform_2(%arg0: i32) -> (i32, i32, i32) {
    %c0_i32 = arith.constant 0 : i32
    %c0_i32_0 = arith.constant 0 : i32
    %c0_i32_1 = arith.constant 0 : i32
    return %arg0, %c0_i32, %c0_i32_0 : i32, i32, i32
  }
  func.func @transform_3(%arg0: i32) -> (i32, i32, i32) {
    %c0_i32 = arith.constant 0 : i32
    %c0_i32_0 = arith.constant 0 : i32
    %c0_i32_1 = arith.constant 0 : i32
    return %arg0, %c0_i32, %c0_i32_0 : i32, i32, i32
  }
  func.func @transform_4(%arg0: i32) -> (i32, i32) {
    %c0_i32 = arith.constant 0 : i32
    %c0_i32_0 = arith.constant 0 : i32
    %c0_i32_1 = arith.constant 0 : i32
    return %c0_i32, %c0_i32_0 : i32, i32
  }
  func.func @transform_5(%arg0: i32) -> (i32, i32) {
    %c0_i32 = arith.constant 0 : i32
    %c0_i32_0 = arith.constant 0 : i32
    %c0_i32_1 = arith.constant 0 : i32
    return %c0_i32, %c0_i32_0 : i32, i32
  }
}

module attributes {stable_mosaic.version = 11 : i64} {
  func.func @_final_kernel(%arg0: memref<16x16xf32, #tpu.memory_space<vmem>>, %arg1: memref<16x16xf32, #tpu.memory_space<vmem>>, %arg2: memref<16x16xf32, #tpu.memory_space<vmem>>, %arg3: memref<16x256xf32, #tpu.memory_space<vmem>>, %arg4: memref<1x256xf32, #tpu.memory_space<vmem>>, %arg5: memref<16x256xf32, #tpu.memory_space<vmem>>, %arg6: memref<16x16xf32, #tpu.memory_space<vmem>>) attributes {dimension_semantics = [], scalar_prefetch = 0 : i64, scratch_operands = 0 : i64, tpu.core_type = #tpu.core_type<tc>} {
    %c0 = arith.constant 0 : index
    %c0_0 = arith.constant 0 : index
    %0 = vector.load %arg0[%c0, %c0_0] : memref<16x16xf32, #tpu.memory_space<vmem>>, vector<16x16xf32>
    %c0_1 = arith.constant 0 : index
    %c0_2 = arith.constant 0 : index
    %1 = vector.load %arg1[%c0_1, %c0_2] : memref<16x16xf32, #tpu.memory_space<vmem>>, vector<16x16xf32>
    %2 = arith.mulf %0, %1 : vector<16x16xf32>
    %3 = arith.truncf %2 : vector<16x16xf32> to vector<16x16xbf16>
    %c0_3 = arith.constant 0 : index
    %c0_4 = arith.constant 0 : index
    %4 = vector.load %arg2[%c0_3, %c0_4] : memref<16x16xf32, #tpu.memory_space<vmem>>, vector<16x16xf32>
    %5 = arith.truncf %4 : vector<16x16xf32> to vector<16x16xbf16>
    %c0_5 = arith.constant 0 : index
    %c0_6 = arith.constant 0 : index
    %6 = vector.load %arg3[%c0_5, %c0_6] : memref<16x256xf32, #tpu.memory_space<vmem>>, vector<16x256xf32>
    %7 = arith.truncf %6 : vector<16x256xf32> to vector<16x256xbf16>
    %cst = arith.constant dense<0.000000e+00> : vector<16x256xf32>
    %8 = tpu.matmul %5, %7, %cst {dimension_numbers = #tpu.dot_dimension_numbers<[1], [0], [0], [1], [0, 0, 1, 1], [], []>} : vector<16x16xbf16>, vector<16x256xbf16>, vector<16x256xf32> -> vector<16x256xf32>
    %9 = arith.truncf %8 : vector<16x256xf32> to vector<16x256xbf16>
    %cst_7 = arith.constant dense<0.000000e+00> : vector<16x256xf32>
    %10 = tpu.matmul %3, %9, %cst_7 {dimension_numbers = #tpu.dot_dimension_numbers<[1], [0], [0], [1], [0, 0, 1, 1], [], []>} : vector<16x16xbf16>, vector<16x256xbf16>, vector<16x256xf32> -> vector<16x256xf32>
    %c0_8 = arith.constant 0 : index
    %c0_9 = arith.constant 0 : index
    %11 = vector.load %arg4[%c0_8, %c0_9] : memref<1x256xf32, #tpu.memory_space<vmem>>, vector<1x256xf32>
    %12 = vector.broadcast %11 : vector<1x256xf32> to vector<16x256xf32>
    %13 = arith.addf %10, %12 : vector<16x256xf32>
    %cst_10 = arith.constant 0.000000e+00 : f32
    %14 = vector.broadcast %cst_10 : f32 to vector<16x256xf32>
    %15 = arith.maximumf %13, %14 : vector<16x256xf32>
    %c0_11 = arith.constant 0 : index
    %c0_12 = arith.constant 0 : index
    %16 = vector.load %arg5[%c0_11, %c0_12] : memref<16x256xf32, #tpu.memory_space<vmem>>, vector<16x256xf32>
    tpu.vector_store %arg5[%c0_11, %c0_12], %15 {strides = array<i32>} : memref<16x256xf32, #tpu.memory_space<vmem>>, vector<16x256xf32>,
    %17 = vector.extract_strided_slice %15 {offsets = [0, 0], sizes = [16, 128], strides = [1, 1]} : vector<16x256xf32> to vector<16x128xf32>
    %18 = arith.truncf %17 : vector<16x128xf32> to vector<16x128xbf16>
    %cst_13 = arith.constant dense<0.000000e+00> : vector<16x16xf32>
    %19 = tpu.matmul %18, %18, %cst_13 {dimension_numbers = #tpu.dot_dimension_numbers<[1], [1], [0], [0], [0, 0, 1, 0], [], []>} : vector<16x128xbf16>, vector<16x128xbf16>, vector<16x16xf32> -> vector<16x16xf32>
    %20 = arith.negf %19 : vector<16x16xf32>
    %21 = math.exp %20 : vector<16x16xf32>
    %cst_14 = arith.constant 1.000000e+00 : f32
    %22 = vector.broadcast %cst_14 : f32 to vector<16x16xf32>
    %23 = arith.addf %22, %21 : vector<16x16xf32>
    %24 = arith.divf %22, %23 : vector<16x16xf32>
    %c0_15 = arith.constant 0 : index
    %c0_16 = arith.constant 0 : index
    %25 = vector.load %arg6[%c0_15, %c0_16] : memref<16x16xf32, #tpu.memory_space<vmem>>, vector<16x16xf32>
    tpu.vector_store %arg6[%c0_15, %c0_16], %24 {strides = array<i32>} : memref<16x16xf32, #tpu.memory_space<vmem>>, vector<16x16xf32>,
    return
  }
}

</mosaic_0001>

<llo_original>
// kernel: squeeze.35
$region0: #{squeeze.35}
  %s0 = inlined_call_operand.vmem [shape: f32[512], index: 0, kind: input, shape index: {}]
  %s1 = inlined_call_operand.vmem [shape: f32[2,16,16], index: 1, kind: output, shape index: {}]
  $region1: #{squeeze.35} parent=0
    #allocation0 [shape = 'u8[4096]{0}', space=vmem, size = 0x1000, scoped, tag = 'scoped mem for input reshape']
    %s3 = ssub.s32 16, 1
    %v4 = vld [vmem:[%s0] sm:%s3]
    %5 = vst [vmem:[#allocation0] sm:%s3] %v4
    %v6 = vld [vmem:[#allocation0] sm:$0xf]
    %vm7 = vcmask 130048
    %8 = vst.msk [vmem:[%s1] ss:$8 sm:$0xf] %vm7, %v6
    %v9 = vld [vmem:[#allocation0] sm:$0xf]
    %10 = vrot.lane.b32.xlu0 %v9, 112
    %v11 = vpop.permute.xlu0 %10
    %vm12 = vcmask 130048
    %s13 = scalar_lea.vmem %s1, 1
    %14 = vst.msk [vmem:[%s13] ss:$8 sm:$0xf] %vm12, %v11
    %v15 = vld [vmem:[#allocation0] sm:$0xf]
    %16 = vrot.lane.b32.xlu0 %v15, 96
    %v17 = vpop.permute.xlu0 %16
    %vm18 = vcmask 130048
    %s19 = scalar_lea.vmem %s1, 2
    %20 = vst.msk [vmem:[%s19] ss:$8 sm:$0xf] %vm18, %v17
    %v21 = vld [vmem:[#allocation0] sm:$0xf]
    %22 = vrot.lane.b32.xlu0 %v21, 80
    %v23 = vpop.permute.xlu0 %22
    %vm24 = vcmask 130048
    %s25 = scalar_lea.vmem %s1, 3
    %26 = vst.msk [vmem:[%s25] ss:$8 sm:$0xf] %vm24, %v23
    %v27 = vld [vmem:[#allocation0] sm:$0xf]
    %28 = vrot.lane.b32.xlu0 %v27, 64
    %v29 = vpop.permute.xlu0 %28
    %vm30 = vcmask 130048
    %s31 = scalar_lea.vmem %s1, 4
    %32 = vst.msk [vmem:[%s31] ss:$8 sm:$0xf] %vm30, %v29
    %v33 = vld [vmem:[#allocation0] sm:$0xf]
    %34 = vrot.lane.b32.xlu0 %v33, 48
    %v35 = vpop.permute.xlu0 %34
    %vm36 = vcmask 130048
    %s37 = scalar_lea.vmem %s1, 5
    %38 = vst.msk [vmem:[%s37] ss:$8 sm:$0xf] %vm36, %v35
    %v39 = vld [vmem:[#allocation0] sm:$0xf]
    %40 = vrot.lane.b32.xlu0 %v39, 32
    %v41 = vpop.permute.xlu0 %40
    %vm42 = vcmask 130048
    %s43 = scalar_lea.vmem %s1, 6
    %44 = vst.msk [vmem:[%s43] ss:$8 sm:$0xf] %vm42, %v41
    %v45 = vld [vmem:[#allocation0] sm:$0xf]
    %46 = vrot.lane.b32.xlu0 %v45, 16
    %v47 = vpop.permute.xlu0 %46
    %vm48 = vcmask 130048
    %s49 = scalar_lea.vmem %s1, 7
    %50 = vst.msk [vmem:[%s49] ss:$8 sm:$0xf] %vm48, %v47

// kernel: vbgae_forward.5
$region0: #{vbgae_forward.5}
  #allocation0 [shape = 'u32[]', space=smem, size = 0x4, offset = 0x4, fixed_abs, tag = 'smem constant byte address 0x4 - core index']
  #allocation1 [shape = 'u32[72,128]{1,0:T(1,128)}', space=vmem, size = 0x9000, scoped, tag = 'internal scratch']
  %s0 = inlined_call_operand.vmem [shape: f32[16,16], index: 0, kind: input, shape index: {}]
  %s1 = inlined_call_operand.vmem [shape: f32[16,16], index: 1, kind: input, shape index: {}]
  %s2 = inlined_call_operand.vmem [shape: f32[16,32], index: 2, kind: input, shape index: {}]
  %s3 = inlined_call_operand.vmem [shape: f32[32,128], index: 3, kind: input, shape index: {}]
  %s4 = inlined_call_operand.vmem [shape: f32[1,128], index: 4, kind: input, shape index: {}]
  %s5 = inlined_call_operand.vmem [shape: f32[16,128], index: 5, kind: output, shape index: {}]
  %s6 = sld [smem:[#allocation0]]
  $region30: #{vbgae_forward.5} parent=0
    _
  %s8 = ssub.s32 1, %s6
  %s9 = scalar_select 0, %s8, %s6
  // Predicated region
  $region2: #{vbgae_forward.5} parent=0 // pred_check
    _
  $region3: #{vbgae_forward.5} parent=0 // pred_check_branch
    %11 = sbr.rel (0) target = $region5
  $region4: #{vbgae_forward.5} parent=0 // pred_region
    _
  $region5: #{vbgae_forward.5} parent=0 // pred_fallthru
    _
  // Predicated region
  $region6: #{vbgae_forward.5} parent=0 // pred_check
    _
  $region7: #{vbgae_forward.5} parent=0 // pred_check_branch
    %13 = sbr.rel (0) target = $region9
  $region8: #{vbgae_forward.5} parent=0 // pred_region
    _
  $region9: #{vbgae_forward.5} parent=0 // pred_fallthru
    _
  // Predicated region
  $region10: #{vbgae_forward.5} parent=0 // pred_check
    _
  $region11: #{vbgae_forward.5} parent=0 // pred_check_branch
    %15 = sbr.rel (0) target = $region13
  $region12: #{vbgae_forward.5} parent=0 // pred_region
    _
  $region13: #{vbgae_forward.5} parent=0 // pred_fallthru
    _
  // Predicated region
  $region14: #{vbgae_forward.5} parent=0 // pred_check
    _
  $region15: #{vbgae_forward.5} parent=0 // pred_check_branch
    %17 = sbr.rel (0) target = $region17
  $region16: #{vbgae_forward.5} parent=0 // pred_region
    _
  $region17: #{vbgae_forward.5} parent=0 // pred_fallthru
    _
  // Predicated region
  $region18: #{vbgae_forward.5} parent=0 // pred_check
    _
  $region19: #{vbgae_forward.5} parent=0 // pred_check_branch
    %19 = sbr.rel (0) target = $region21
  $region20: #{vbgae_forward.5} parent=0 // pred_region
    _
  $region21: #{vbgae_forward.5} parent=0 // pred_fallthru
    _
  %v21 = vld [vmem:[%s0] sm:$0xff]
  %v22 = vld [vmem:[%s0 + $0x8] sm:$0xff]
  %v23 = vld [vmem:[%s1] sm:$0xff]
  %v24 = vld [vmem:[%s1 + $0x8] sm:$0xff]
  %v25 = vmul.f32 %v21, %v23
  %v26 = vmul.f32 %v22, %v24
  %v27 = vpack.c.bf16 %v26, %v25
  %v28 = vld [vmem:[%s2] sm:$0xff]
  %v29 = vld [vmem:[%s2 + $0x8] sm:$0xff]
  %v30 = vpack.c.bf16 %v29, %v28
  %v31 = vld [vmem:[%s3] sm:$0xff]
  %v32 = vld [vmem:[%s3 + $0x8] sm:$0xff]
  %v33 = vld [vmem:[%s3 + $0x10] sm:$0xff]
  %v34 = vld [vmem:[%s3 + $0x18] sm:$0xff]
  %v35 = vpack.c.bf16 %v32, %v31
  %v36 = vpack.c.bf16 %v34, %v33
  %vm37 = vcmask 261120
  %v39 = vsel %vm37, %v30, 0
  %41 = vmatpush.bf16.msra.mxu0 0
  %42 = vmatpush.bf16.msra.mxu0 0
  %43 = vmatpush.bf16.msra.mxu0 0
  %44 = vmatpush.bf16.msra.mxu0 0
  %45 = vmatpush.bf16.msra.mxu0 0
  %46 = vmatpush.bf16.msra.mxu0 0
  %47 = vmatpush.bf16.msra.mxu0 %v36
  %48 = vmatpush.bf16.msra.mxu0 %v35
  %49 = vmatmul.bf16.gmra.mxu0 %v39
  %v50 = vpop.f32.mrf.mxu0
  %v51 = vadd.f32 0.0, %v50
  %v52 = vpop.f32.mrf.mxu0
  %v53 = vadd.f32 0.0, %v52
  %54 = vdwg.mxu0
  %v55 = vpack.c.bf16 %v53, %v51
  %v56 = vld [vmem:[%s4] sm:$0x1]
  %v58 = vperm.slane %v56, 0
  %vm60 = vcmask 130048
  %v62 = vsel %vm60, %v27, 0
  %64 = vmatpush.bf16.msra.mxu0 0
  %65 = vmatpush.bf16.msra.mxu0 0
  %66 = vmatpush.bf16.msra.mxu0 0
  %67 = vmatpush.bf16.msra.mxu0 0
  %68 = vmatpush.bf16.msra.mxu0 0
  %69 = vmatpush.bf16.msra.mxu0 0
  %70 = vmatpush.bf16.msra.mxu0 0
  %71 = vmatpush.bf16.msra.mxu0 %v55
  %72 = vmatmul.bf16.gmra.mxu0 %v62
  %v73 = vpop.f32.mrf.mxu0
  %v74 = vadd.f32 %v58, %v73
  %v75 = vpop.f32.mrf.mxu0
  %v76 = vadd.f32 %v58, %v75
  %77 = vdwg.mxu0
  %v78 = vmax.f32 %v74, 0.0
  %v79 = vmax.f32 %v76, 0.0
  %80 = vst [vmem:[%s5] sm:$0xff] %v78
  %81 = vst [vmem:[%s5 + $0x8] sm:$0xff] %v79
  // Predicated region
  $region22: #{vbgae_forward.5} parent=0 // pred_check
    _
  $region23: #{vbgae_forward.5} parent=0 // pred_check_branch
    %83 = sbr.rel (0) target = $region25
  $region24: #{vbgae_forward.5} parent=0 // pred_region
    _
  $region25: #{vbgae_forward.5} parent=0 // pred_fallthru
    _
  // Predicated region
  $region26: #{vbgae_forward.5} parent=0 // pred_check
    _
  $region27: #{vbgae_forward.5} parent=0 // pred_check_branch
    %85 = sbr.rel (0) target = $region29
  $region28: #{vbgae_forward.5} parent=0 // pred_region
    _
  $region29: #{vbgae_forward.5} parent=0 // pred_fallthru
    _

// kernel: vbgae_forward.6
$region0: #{vbgae_forward.6}
  #allocation0 [shape = 'u32[]', space=smem, size = 0x4, offset = 0x4, fixed_abs, tag = 'smem constant byte address 0x4 - core index']
  #allocation1 [shape = 'u32[72,128]{1,0:T(1,128)}', space=vmem, size = 0x9000, scoped, tag = 'internal scratch']
  #allocation2 [shape = 'f32[16,128]{1,0:T(8,128)}', space=vmem, size = 0x2000, scoped, tag = 'scratch operand']
  %s0 = inlined_call_operand.vmem [shape: f32[2,16,16], index: 0, kind: input, shape index: {}]
  %s1 = inlined_call_operand.vmem [shape: f32[16,16], index: 1, kind: input, shape index: {}]
  %s2 = inlined_call_operand.vmem [shape: f32[2,16,8], index: 2, kind: input, shape index: {}]
  %s3 = inlined_call_operand.vmem [shape: f32[2,8,128], index: 3, kind: input, shape index: {}]
  %s4 = inlined_call_operand.vmem [shape: f32[1,128], index: 4, kind: input, shape index: {}]
  %s5 = inlined_call_operand.vmem [shape: f32[16,128], index: 5, kind: output, shape index: {}]
  %s6 = sld [smem:[#allocation0]]
  $region61: #{vbgae_forward.6} parent=0
    _
  %s8 = ssub.s32 1, %s6
  %s9 = scalar_select 0, %s8, %s6
  loop: start=0, step=1, limit=4
  $region2: #{vbgae_forward.6} parent=0 // loop_pre_header
    _
  $region3: #{vbgae_forward.6} parent=0 // loop_header
    %s11 = sphi 0, %s15
    %p12 = scmp.ge.s32.totalorder %s11, 4
    %s21 = sphi 0, %s23
    %s24 = sphi 0, %s21
    %s25 = sphi 0, %s24
    %s41 = sphi 0, %s25
    %s45 = sphi 0, %s45
    %s47 = sphi 0, %s45
    %s48 = sphi 0, %s47
    %s62 = sphi 0, %s48
    %s68 = sphi 0, %s70
    %s71 = sphi 0, %s68
    %s72 = sphi 0, %s71
    %s88 = sphi 0, %s72
    %s94 = sphi 0, %s96
    %s97 = sphi 0, %s94
    %s98 = sphi 0, %s97
    %s114 = sphi 0, %s98
    %s118 = sphi 0, %s118
    %s120 = sphi 0, %s118
    %s121 = sphi 0, %s120
    %s135 = sphi 0, %s121
    %s139 = sphi 0, %s139
    %s141 = sphi 0, %s139
    %s142 = sphi 0, %s141
    %s156 = sphi 0, %s142
  $region4: #{vbgae_forward.6} parent=0 // loop_header_branch
    %14 = sbr.rel (%p12) target = $region8
  $region5: #{vbgae_forward.6} parent=0 // loop_body
    %s16 = ssub.s32 %s11, 1
    %s17 = ssub.s32 %s11, 2
    %s18 = sadd.s32 %s11, 1
    %s19 = ssub.s32 %s11, %s18
    %p20 = scmp.eq.s32.totalorder %s19, 0
    %s22 = sadd.s32 %s21, 1
    %s23 = scalar_select %p20, %s21, %s22
    %p26 = pneg %p20
    %p27 = scmp.eq.s32.totalorder %s11, 1
    %p28 = por %p26, %p27
    %p29 = scmp.ne.s32.totalorder %s21, %s24
    %p30 = scmp.eq.s32.totalorder %s11, 0
    %p31 = por %p29, %p30
    %p32 = scmp.ne.s32.totalorder %s21, %s24
    %p33 = scmp.eq.s32.totalorder %s16, 1
    %p34 = por %p32, %p33
    %p35 = scmp.ne.s32.totalorder %s24, %s25
    %p36 = scmp.eq.s32.totalorder %s16, 0
    %p37 = por %p35, %p36
    %p38 = scmp.ne.s32.totalorder %s24, %s25
    %p39 = scmp.eq.s32.totalorder %s17, 1
    %p40 = por %p38, %p39
    %p42 = scmp.ne.s32.totalorder %s25, %s41
    %p43 = scmp.eq.s32.totalorder %s17, 0
    %p44 = por %p42, %p43
    %s46 = sadd.s32 %s45, 1
    %p49 = scmp.eq.s32.totalorder %s11, 1
    %p50 = scmp.ne.s32.totalorder %s45, %s47
    %p51 = scmp.eq.s32.totalorder %s11, 0
    %p52 = por %p50, %p51
    %p53 = scmp.ne.s32.totalorder %s45, %s47
    %p54 = scmp.eq.s32.totalorder %s16, 1
    %p55 = por %p53, %p54
    %p56 = scmp.ne.s32.totalorder %s47, %s48
    %p57 = scmp.eq.s32.totalorder %s16, 0
    %p58 = por %p56, %p57
    %p59 = scmp.ne.s32.totalorder %s47, %s48
    %p60 = scmp.eq.s32.totalorder %s17, 1
    %p61 = por %p59, %p60
    %p63 = scmp.ne.s32.totalorder %s48, %s62
    %p64 = scmp.eq.s32.totalorder %s17, 0
    %p65 = por %p63, %p64
    %s66 = ssub.s32 %s11, %s18
    %p67 = scmp.eq.s32.totalorder %s66, 0
    %s69 = sadd.s32 %s68, 1
    %s70 = scalar_select %p67, %s68, %s69
    %p73 = pneg %p67
    %p74 = scmp.eq.s32.totalorder %s11, 1
    %p75 = por %p73, %p74
    %p76 = scmp.ne.s32.totalorder %s68, %s71
    %p77 = scmp.eq.s32.totalorder %s11, 0
    %p78 = por %p76, %p77
    %p79 = scmp.ne.s32.totalorder %s68, %s71
    %p80 = scmp.eq.s32.totalorder %s16, 1
    %p81 = por %p79, %p80
    %p82 = scmp.ne.s32.totalorder %s71, %s72
    %p83 = scmp.eq.s32.totalorder %s16, 0
    %p84 = por %p82, %p83
    %p85 = scmp.ne.s32.totalorder %s71, %s72
    %p86 = scmp.eq.s32.totalorder %s17, 1
    %p87 = por %p85, %p86
    %p89 = scmp.ne.s32.totalorder %s72, %s88
    %p90 = scmp.eq.s32.totalorder %s17, 0
    %p91 = por %p89, %p90
    %s92 = ssub.s32 %s11, %s18
    %p93 = scmp.eq.s32.totalorder %s92, 0
    %s95 = sadd.s32 %s94, 1
    %s96 = scalar_select %p93, %s94, %s95
    %p99 = pneg %p93
    %p100 = scmp.eq.s32.totalorder %s11, 1
    %p101 = por %p99, %p100
    %p102 = scmp.ne.s32.totalorder %s94, %s97
    %p103 = scmp.eq.s32.totalorder %s11, 0
    %p104 = por %p102, %p103
    %p105 = scmp.ne.s32.totalorder %s94, %s97
    %p106 = scmp.eq.s32.totalorder %s16, 1
    %p107 = por %p105, %p106
    %p108 = scmp.ne.s32.totalorder %s97, %s98
    %p109 = scmp.eq.s32.totalorder %s16, 0
    %p110 = por %p108, %p109
    %p111 = scmp.ne.s32.totalorder %s97, %s98
    %p112 = scmp.eq.s32.totalorder %s17, 1
    %p113 = por %p111, %p112
    %p115 = scmp.ne.s32.totalorder %s98, %s114
    %p116 = scmp.eq.s32.totalorder %s17, 0
    %p117 = por %p115, %p116
    %s119 = sadd.s32 %s118, 1
    %p122 = scmp.eq.s32.totalorder %s11, 1
    %p123 = scmp.ne.s32.totalorder %s118, %s120
    %p124 = scmp.eq.s32.totalorder %s11, 0
    %p125 = por %p123, %p124
    %p126 = scmp.ne.s32.totalorder %s118, %s120
    %p127 = scmp.eq.s32.totalorder %s16, 1
    %p128 = por %p126, %p127
    %p129 = scmp.ne.s32.totalorder %s120, %s121
    %p130 = scmp.eq.s32.totalorder %s16, 0
    %p131 = por %p129, %p130
    %p132 = scmp.ne.s32.totalorder %s120, %s121
    %p133 = scmp.eq.s32.totalorder %s17, 1
    %p134 = por %p132, %p133
    %p136 = scmp.ne.s32.totalorder %s121, %s135
    %p137 = scmp.eq.s32.totalorder %s17, 0
    %p138 = por %p136, %p137
    %s140 = sadd.s32 %s139, 1
    %p143 = scmp.eq.s32.totalorder %s11, 1
    %p144 = scmp.ne.s32.totalorder %s139, %s141
    %p145 = scmp.eq.s32.totalorder %s11, 0
    %p146 = por %p144, %p145
    %p147 = scmp.ne.s32.totalorder %s139, %s141
    %p148 = scmp.eq.s32.totalorder %s16, 1
    %p149 = por %p147, %p148
    %p150 = scmp.ne.s32.totalorder %s141, %s142
    %p151 = scmp.eq.s32.totalorder %s16, 0
    %p152 = por %p150, %p151
    %p153 = scmp.ne.s32.totalorder %s141, %s142
    %p154 = scmp.eq.s32.totalorder %s17, 1
    %p155 = por %p153, %p154
    %p157 = scmp.ne.s32.totalorder %s142, %s156
    %p158 = scmp.eq.s32.totalorder %s17, 0
    %p159 = por %p157, %p158
    %p160 = scmp.le.s32.totalorder 1, %s11
    %p161 = scmp.lt.s32.totalorder %s11, 3
    %p162 = pnand %p160, %p161
    %p163 = pneg %p162
    // Predicated region
    $region9: #{vbgae_forward.6} parent=5 // pred_check
      _
    $region10: #{vbgae_forward.6} parent=5 // pred_check_branch
      %165 = sbr.rel (%p162) target = $region12
    $region11: #{vbgae_forward.6} parent=5 // pred_region
      %s166 = ssub.s32 %s11, 1
      // Predicated region
      $region13: #{vbgae_forward.6} parent=11 // pred_check
        %p167 = pneg %p58
      $region14: #{vbgae_forward.6} parent=11 // pred_check_branch
        %169 = sbr.rel (%p167) target = $region16
      $region15: #{vbgae_forward.6} parent=11 // pred_region
        _
      $region16: #{vbgae_forward.6} parent=11 // pred_fallthru
        _
      // Predicated region
      $region17: #{vbgae_forward.6} parent=11 // pred_check
        %p170 = pneg %p131
      $region18: #{vbgae_forward.6} parent=11 // pred_check_branch
        %172 = sbr.rel (%p170) target = $region20
      $region19: #{vbgae_forward.6} parent=11 // pred_region
        _
      $region20: #{vbgae_forward.6} parent=11 // pred_fallthru
        _
    $region12: #{vbgae_forward.6} parent=5 // pred_fallthru
      _
    %p173 = scmp.lt.s32.totalorder %s11, 2
    // Predicated region
    $region21: #{vbgae_forward.6} parent=5 // pred_check
      %p174 = pneg %p173
    $region22: #{vbgae_forward.6} parent=5 // pred_check_branch
      %176 = sbr.rel (%p174) target = $region24
    $region23: #{vbgae_forward.6} parent=5 // pred_region
      // Predicated region
      $region25: #{vbgae_forward.6} parent=23 // pred_check
        %p177 = pneg %p31
      $region26: #{vbgae_forward.6} parent=23 // pred_check_branch
        %179 = sbr.rel (%p177) target = $region28
      $region27: #{vbgae_forward.6} parent=23 // pred_region
        %p180 = scmp.lt.s32.totalorder %s11, 1
        %s181 = scalar_select %p180, %s11, 1
        %s182 = smul.addr %s181, 2
        %s183 = smul.addr %s182, 8
        %s184 = scalar_lea.vmem %s0, %s183
      $region28: #{vbgae_forward.6} parent=23 // pred_fallthru
        _
      // Predicated region
      $region29: #{vbgae_forward.6} parent=23 // pred_check
        %p185 = pneg %p78
      $region30: #{vbgae_forward.6} parent=23 // pred_check_branch
        %187 = sbr.rel (%p185) target = $region32
      $region31: #{vbgae_forward.6} parent=23 // pred_region
        %p188 = scmp.lt.s32.totalorder %s11, 1
        %s189 = scalar_select %p188, %s11, 1
        %s190 = smul.addr %s189, 2
        %s191 = smul.addr %s190, 8
        %s192 = scalar_lea.vmem %s2, %s191
      $region32: #{vbgae_forward.6} parent=23 // pred_fallthru
        _
      // Predicated region
      $region33: #{vbgae_forward.6} parent=23 // pred_check
        %p193 = pneg %p104
      $region34: #{vbgae_forward.6} parent=23 // pred_check_branch
        %195 = sbr.rel (%p193) target = $region36
      $region35: #{vbgae_forward.6} parent=23 // pred_region
        %p196 = scmp.lt.s32.totalorder %s11, 1
        %s197 = scalar_select %p196, %s11, 1
        %s198 = smul.addr %s197, 8
        %s199 = scalar_lea.vmem %s3, %s198
      $region36: #{vbgae_forward.6} parent=23 // pred_fallthru
        _
    $region24: #{vbgae_forward.6} parent=5 // pred_fallthru
      _
    %p200 = scmp.le.s32.totalorder 1, %s11
    %p201 = scmp.lt.s32.totalorder %s11, 3
    %p202 = pnand %p200, %p201
    %p203 = pneg %p202
    // Predicated region
    $region37: #{vbgae_forward.6} parent=5 // pred_check
      _
    $region38: #{vbgae_forward.6} parent=5 // pred_check_branch
      %205 = sbr.rel (%p202) target = $region40
    $region39: #{vbgae_forward.6} parent=5 // pred_region
      %s206 = ssub.s32 %s11, 1
      %p207 = scmp.lt.s32.totalorder %s16, 1
      %s208 = scalar_select %p207, %s16, 1
      %s209 = smul.addr %s208, 2
      %s210 = smul.addr %s209, 8
      %s211 = scalar_lea.vmem %s0, %s210
      %p212 = pneg %p37
      %p213 = pneg %p34
      %p214 = pneg %p58
      %p215 = pneg %p55
      %p216 = scmp.lt.s32.totalorder %s16, 1
      %s217 = scalar_select %p216, %s16, 1
      %s218 = smul.addr %s217, 2
      %s219 = smul.addr %s218, 8
      %s220 = scalar_lea.vmem %s2, %s219
      %p221 = pneg %p84
      %p222 = pneg %p81
      %p223 = scmp.lt.s32.totalorder %s16, 1
      %s224 = scalar_select %p223, %s16, 1
      %s225 = smul.addr %s224, 8
      %s226 = scalar_lea.vmem %s3, %s225
      %p227 = pneg %p110
      %p228 = pneg %p107
      %p229 = pneg %p131
      %p230 = pneg %p128
      %p231 = pneg %p152
      %p232 = pneg %p149
      %p233 = scmp.lt.s32.totalorder %s16, 1
      %s234 = scalar_select %p233, %s16, 1
      %s235 = smul.addr %s234, 2
      %s236 = smul.addr %s235, 8
      %s237 = scalar_lea.vmem %s0, %s236
      %p238 = scmp.lt.s32.totalorder %s16, 1
      %s239 = scalar_select %p238, %s16, 1
      %s240 = smul.addr %s239, 2
      %s241 = smul.addr %s240, 8
      %s242 = scalar_lea.vmem %s2, %s241
      %p243 = scmp.lt.s32.totalorder %s16, 1
      %s244 = scalar_select %p243, %s16, 1
      %s245 = smul.addr %s244, 8
      %s246 = scalar_lea.vmem %s3, %s245
      %p248 = scmp.eq.s32.totalorder %s16, 0
      // Predicated region
      $region41: #{vbgae_forward.6} parent=39 // pred_check
        %p249 = pneg %p248
      $region42: #{vbgae_forward.6} parent=39 // pred_check_branch
        %251 = sbr.rel (%p249) target = $region44
      $region43: #{vbgae_forward.6} parent=39 // pred_region
        %252 = vst [vmem:[#allocation2] sm:$0xff] 0.0
        %253 = vst [vmem:[#allocation2 + $0x8] sm:$0xff] 0.0
      $region44: #{vbgae_forward.6} parent=39 // pred_fallthru
        _
      %v254 = vld [vmem:[%s237] sm:$0xff]
      %v255 = vld [vmem:[%s237 + $0x8] sm:$0xff]
      %v256 = vld [vmem:[%s1] sm:$0xff]
      %v257 = vld [vmem:[%s1 + $0x8] sm:$0xff]
      %v258 = vmul.f32 %v254, %v256
      %v259 = vmul.f32 %v255, %v257
      %v260 = vpack.c.bf16 %v259, %v258
      %v261 = vld [vmem:[%s242] sm:$0xff]
      %v262 = vld [vmem:[%s242 + $0x8] sm:$0xff]
      %v263 = vpack.c.bf16 %v262, %v261
      %v264 = vld [vmem:[%s246] sm:$0xff]
      %v265 = vpack.c.bf16 %v264, %v264
      %vm266 = vcmask 64512
      %v268 = vsel %vm266, %v263, 0
      %vm270 = vcmask 1043456
      %v272 = vsel %vm270, %v265, 0
      %274 = vmatpush.bf16.msra.mxu0 0
      %275 = vmatpush.bf16.msra.mxu0 0
      %276 = vmatpush.bf16.msra.mxu0 0
      %277 = vmatpush.bf16.msra.mxu0 0
      %278 = vmatpush.bf16.msra.mxu0 0
      %279 = vmatpush.bf16.msra.mxu0 0
      %280 = vmatpush.bf16.msra.mxu0 0
      %281 = vmatpush.bf16.msra.mxu0 %v272
      %282 = vmatmul.bf16.gmra.mxu0 %v268
      %v283 = vpop.f32.mrf.mxu0
      %v284 = vadd.f32 0.0, %v283
      %v285 = vpop.f32.mrf.mxu0
      %v286 = vadd.f32 0.0, %v285
      %287 = vdwg.mxu0
      %v288 = vld [vmem:[#allocation2] sm:$0xff]
      %v289 = vld [vmem:[#allocation2 + $0x8] sm:$0xff]
      %v290 = vpack.c.bf16 %v286, %v284
      %vm291 = vcmask 130048
      %v293 = vsel %vm291, %v260, 0
      %295 = vmatpush.bf16.msra.mxu0 0
      %296 = vmatpush.bf16.msra.mxu0 0
      %297 = vmatpush.bf16.msra.mxu0 0
      %298 = vmatpush.bf16.msra.mxu0 0
      %299 = vmatpush.bf16.msra.mxu0 0
      %300 = vmatpush.bf16.msra.mxu0 0
      %301 = vmatpush.bf16.msra.mxu0 0
      %302 = vmatpush.bf16.msra.mxu0 %v290
      %303 = vmatmul.bf16.gmra.mxu0 %v293
      %v304 = vpop.f32.mrf.mxu0
      %v305 = vadd.f32 0.0, %v304
      %v306 = vpop.f32.mrf.mxu0
      %v307 = vadd.f32 0.0, %v306
      %308 = vdwg.mxu0
      %v309 = vadd.f32 %v288, %v305
      %v310 = vadd.f32 %v289, %v307
      %311 = vst [vmem:[#allocation2] sm:$0xff] %v309
      %312 = vst [vmem:[#allocation2 + $0x8] sm:$0xff] %v310
      %p313 = scmp.eq.s32.totalorder %s16, 1
      // Predicated region
      $region45: #{vbgae_forward.6} parent=39 // pred_check
        %p314 = pneg %p313
      $region46: #{vbgae_forward.6} parent=39 // pred_check_branch
        %316 = sbr.rel (%p314) target = $region48
      $region47: #{vbgae_forward.6} parent=39 // pred_region
        %v317 = vld [vmem:[#allocation2] sm:$0xff]
        %v318 = vld [vmem:[#allocation2 + $0x8] sm:$0xff]
        %v319 = vld [vmem:[%s4] sm:$0x1]
        %v321 = vperm.slane %v319, 0
        %v323 = vadd.f32 %v317, %v321
        %v324 = vadd.f32 %v318, %v321
        %v325 = vmax.f32 %v323, 0.0
        %v326 = vmax.f32 %v324, 0.0
        %327 = vst [vmem:[%s5] sm:$0xff] %v325
        %328 = vst [vmem:[%s5 + $0x8] sm:$0xff] %v326
      $region48: #{vbgae_forward.6} parent=39 // pred_fallthru
        _
      // Predicated region
      $region49: #{vbgae_forward.6} parent=39 // pred_check
        %p329 = pneg %p149
      $region50: #{vbgae_forward.6} parent=39 // pred_check_branch
        %331 = sbr.rel (%p329) target = $region52
      $region51: #{vbgae_forward.6} parent=39 // pred_region
        _
      $region52: #{vbgae_forward.6} parent=39 // pred_fallthru
        _
      // Predicated region
      $region53: #{vbgae_forward.6} parent=39 // pred_check
        %p332 = pneg %p149
      $region54: #{vbgae_forward.6} parent=39 // pred_check_branch
        %334 = sbr.rel (%p332) target = $region56
      $region55: #{vbgae_forward.6} parent=39 // pred_region
        _
      $region56: #{vbgae_forward.6} parent=39 // pred_fallthru
        _
    $region40: #{vbgae_forward.6} parent=5 // pred_fallthru
      _
    %p335 = scmp.le.s32.totalorder 2, %s11
    // Predicated region
    $region57: #{vbgae_forward.6} parent=5 // pred_check
      %p336 = pneg %p335
    $region58: #{vbgae_forward.6} parent=5 // pred_check_branch
      %338 = sbr.rel (%p336) target = $region60
    $region59: #{vbgae_forward.6} parent=5 // pred_region
      %s339 = ssub.s32 %s11, 2
    $region60: #{vbgae_forward.6} parent=5 // pred_fallthru
      _
  $region6: #{vbgae_forward.6} parent=0 // loop_footer
    %s15 = sadd.s32 1, %s11
  $region7: #{vbgae_forward.6} parent=0 // loop_footer_branch
    %10 = sbr.rel target = $region3
  $region8: #{vbgae_forward.6} parent=0 // loop_exit
    _

// kernel: vbgae_forward.7
$region0: #{vbgae_forward.7}
  #allocation0 [shape = 'u32[]', space=smem, size = 0x4, offset = 0x4, fixed_abs, tag = 'smem constant byte address 0x4 - core index']
  #allocation1 [shape = 'u32[72,128]{1,0:T(1,128)}', space=vmem, size = 0x9000, scoped, tag = 'internal scratch']
  %s0 = inlined_call_operand.vmem [shape: f32[16,16], index: 0, kind: input, shape index: {}]
  %s1 = inlined_call_operand.vmem [shape: f32[16,16], index: 1, kind: input, shape index: {}]
  %s2 = inlined_call_operand.vmem [shape: f32[16,16], index: 2, kind: input, shape index: {}]
  %s3 = inlined_call_operand.vmem [shape: f32[16,256], index: 3, kind: input, shape index: {}]
  %s4 = inlined_call_operand.vmem [shape: f32[1,256], index: 4, kind: input, shape index: {}]
  %s5 = inlined_call_operand.vmem [shape: f32[16,256], index: 5, kind: output, shape index: {0}]
  %s6 = inlined_call_operand.hbm [shape: f32[16,16], index: 6, kind: output, shape index: {1}]
  %7 = xla_tuple %s5, %s6
  %s8 = sld [smem:[#allocation0]]
  $region38: #{vbgae_forward.7} parent=0
    _
  %s10 = ssub.s32 1, %s8
  %s11 = scalar_select 0, %s10, %s8
  $region1: #{vbgae_forward.7} parent=0
    #allocation2 [shape = 'u8[8192]{0}', space=vmem, size = 0x2000, scoped, tag = 'output window, operand 1, single buffered']
    #allocation3 [shape = 's32[1]{0}', space=sflag, size = 0x4, scoped, tag = 'scoped memory for vbgae_forward.7']
    %12 = vsyncpa [#allocation3], 0
    // Predicated region
    $region2: #{vbgae_forward.7} parent=1 // pred_check
      _
    $region3: #{vbgae_forward.7} parent=1 // pred_check_branch
      %14 = sbr.rel (0) target = $region5
    $region4: #{vbgae_forward.7} parent=1 // pred_region
      _
    $region5: #{vbgae_forward.7} parent=1 // pred_fallthru
      _
    // Predicated region
    $region6: #{vbgae_forward.7} parent=1 // pred_check
      _
    $region7: #{vbgae_forward.7} parent=1 // pred_check_branch
      %16 = sbr.rel (0) target = $region9
    $region8: #{vbgae_forward.7} parent=1 // pred_region
      _
    $region9: #{vbgae_forward.7} parent=1 // pred_fallthru
      _
    // Predicated region
    $region10: #{vbgae_forward.7} parent=1 // pred_check
      _
    $region11: #{vbgae_forward.7} parent=1 // pred_check_branch
      %18 = sbr.rel (0) target = $region13
    $region12: #{vbgae_forward.7} parent=1 // pred_region
      _
    $region13: #{vbgae_forward.7} parent=1 // pred_fallthru
      _
    // Predicated region
    $region14: #{vbgae_forward.7} parent=1 // pred_check
      _
    $region15: #{vbgae_forward.7} parent=1 // pred_check_branch
      %20 = sbr.rel (0) target = $region17
    $region16: #{vbgae_forward.7} parent=1 // pred_region
      _
    $region17: #{vbgae_forward.7} parent=1 // pred_fallthru
      _
    // Predicated region
    $region18: #{vbgae_forward.7} parent=1 // pred_check
      _
    $region19: #{vbgae_forward.7} parent=1 // pred_check_branch
      %22 = sbr.rel (0) target = $region21
    $region20: #{vbgae_forward.7} parent=1 // pred_region
      _
    $region21: #{vbgae_forward.7} parent=1 // pred_fallthru
      _
    %v24 = vld [vmem:[%s0] sm:$0xff]
    %v25 = vld [vmem:[%s0 + $0x8] sm:$0xff]
    %v26 = vld [vmem:[%s1] sm:$0xff]
    %v27 = vld [vmem:[%s1 + $0x8] sm:$0xff]
    %v28 = vmul.f32 %v24, %v26
    %v29 = vmul.f32 %v25, %v27
    %v30 = vpack.c.bf16 %v29, %v28
    %v31 = vld [vmem:[%s2] sm:$0xff]
    %v32 = vld [vmem:[%s2 + $0x8] sm:$0xff]
    %v33 = vpack.c.bf16 %v32, %v31
    %v34 = vld [vmem:[%s3] sm:$0xff]
    %v35 = vld [vmem:[%s3 + $0x8] sm:$0xff]
    %v36 = vld [vmem:[%s3 + $0x10] sm:$0xff]
    %v37 = vld [vmem:[%s3 + $0x18] sm:$0xff]
    %v38 = vpack.c.bf16 %v36, %v34
    %v39 = vpack.c.bf16 %v37, %v35
    %vm40 = vcmask 130048
    %v42 = vsel %vm40, %v33, 0
    %44 = vmatpush.bf16.msra.mxu0 0
    %45 = vmatpush.bf16.msra.mxu0 0
    %46 = vmatpush.bf16.msra.mxu0 0
    %47 = vmatpush.bf16.msra.mxu0 0
    %48 = vmatpush.bf16.msra.mxu0 0
    %49 = vmatpush.bf16.msra.mxu0 0
    %50 = vmatpush.bf16.msra.mxu0 0
    %51 = vmatpush.bf16.msra.mxu0 %v38
    %52 = vmatmul.bf16.gmra.mxu0 %v42
    %v53 = vpop.f32.mrf.mxu0
    %v54 = vadd.f32 0.0, %v53
    %v55 = vpop.f32.mrf.mxu0
    %v56 = vadd.f32 0.0, %v55
    %57 = vdwg.mxu0
    %58 = vmatpush.bf16.msra.mxu0 0
    %59 = vmatpush.bf16.msra.mxu0 0
    %60 = vmatpush.bf16.msra.mxu0 0
    %61 = vmatpush.bf16.msra.mxu0 0
    %62 = vmatpush.bf16.msra.mxu0 0
    %63 = vmatpush.bf16.msra.mxu0 0
    %64 = vmatpush.bf16.msra.mxu0 0
    %65 = vmatpush.bf16.msra.mxu0 %v39
    %66 = vmatmul.bf16.gmra.mxu0 %v42
    %v67 = vpop.f32.mrf.mxu0
    %v68 = vadd.f32 0.0, %v67
    %v69 = vpop.f32.mrf.mxu0
    %v70 = vadd.f32 0.0, %v69
    %71 = vdwg.mxu0
    %v72 = vpack.c.bf16 %v56, %v54
    %v73 = vpack.c.bf16 %v70, %v68
    %v74 = vld [vmem:[%s4] sm:$0x3]
    %v76 = vperm.slane %v74, 0
    %v77 = vperm.slane %v74, 1
    %v81 = vsel %vm40, %v30, 0
    %83 = vmatpush.bf16.msra.mxu0 0
    %84 = vmatpush.bf16.msra.mxu0 0
    %85 = vmatpush.bf16.msra.mxu0 0
    %86 = vmatpush.bf16.msra.mxu0 0
    %87 = vmatpush.bf16.msra.mxu0 0
    %88 = vmatpush.bf16.msra.mxu0 0
    %89 = vmatpush.bf16.msra.mxu0 0
    %90 = vmatpush.bf16.msra.mxu0 %v72
    %91 = vmatmul.bf16.gmra.mxu0 %v81
    %v92 = vpop.f32.mrf.mxu0
    %v93 = vadd.f32 %v76, %v92
    %v94 = vpop.f32.mrf.mxu0
    %v95 = vadd.f32 %v76, %v94
    %96 = vdwg.mxu0
    %97 = vmatpush.bf16.msra.mxu0 0
    %98 = vmatpush.bf16.msra.mxu0 0
    %99 = vmatpush.bf16.msra.mxu0 0
    %100 = vmatpush.bf16.msra.mxu0 0
    %101 = vmatpush.bf16.msra.mxu0 0
    %102 = vmatpush.bf16.msra.mxu0 0
    %103 = vmatpush.bf16.msra.mxu0 0
    %104 = vmatpush.bf16.msra.mxu0 %v73
    %105 = vmatmul.bf16.gmra.mxu0 %v81
    %v106 = vpop.f32.mrf.mxu0
    %v107 = vadd.f32 %v77, %v106
    %v108 = vpop.f32.mrf.mxu0
    %v109 = vadd.f32 %v77, %v108
    %110 = vdwg.mxu0
    %v111 = vmax.f32 %v93, 0.0
    %v112 = vmax.f32 %v107, 0.0
    %v113 = vmax.f32 %v95, 0.0
    %v114 = vmax.f32 %v109, 0.0
    %115 = vst [vmem:[%s5] sm:$0xff] %v111
    %116 = vst [vmem:[%s5 + $0x8] sm:$0xff] %v112
    %117 = vst [vmem:[%s5 + $0x10] sm:$0xff] %v113
    %118 = vst [vmem:[%s5 + $0x18] sm:$0xff] %v114
    %v119 = vpack.c.bf16 %v113, %v111
    %120 = vmatpush.bf16.xpose.msra.mxu0 0
    %121 = vmatpush.bf16.xpose.msra.mxu0 0
    %122 = vmatpush.bf16.xpose.msra.mxu0 0
    %123 = vmatpush.bf16.xpose.msra.mxu0 0
    %124 = vmatpush.bf16.xpose.msra.mxu0 0
    %125 = vmatpush.bf16.xpose.msra.mxu0 0
    %126 = vmatpush.bf16.xpose.msra.mxu0 0
    %127 = vmatpush.bf16.xpose.msra.mxu0 %v119
    %128 = vmatmul.bf16.gmra.mxu0 %v119
    %v129 = vpop.f32.mrf.mxu0
    %v130 = vadd.f32 0.0, %v129
    %v131 = vpop.f32.mrf.mxu0
    %v132 = vadd.f32 0.0, %v131
    %133 = vdwg.mxu0
    %v134 = vxor.u32 %v130, 2147483648
    %v135 = vxor.u32 %v132, 2147483648
    %v136 = vmul.f32 %v134, 1.442695
    %v137 = vpow.pop %v136
    %v138 = vmul.f32 %v135, 1.442695
    %v139 = vpow.pop %v138
    %v140 = vadd.f32 %v137, 1.0
    %v141 = vadd.f32 %v139, 1.0
    %v142 = vrcp.pop %v140
    %v143 = vmul.f32 %v140, %v142
    %v144 = vsub.f32 1.0, %v143
    %v145 = vmul.f32 %v142, %v144
    %v146 = vadd.f32 %v142, %v145
    %vm147 = vweird.f32 %v140
    %vm148 = vweird.f32 %v142
    %vm149 = vmor %vm147, %vm148
    %v150 = vsel %vm149, %v142, %v146
    %v151 = vand.u32 2147483647, %v140
    %vm152 = vcmp.eq.f32.partialorder %v151, 8.507059e+37
    %v153 = vand.u32 %v140, 2147483648
    %v154 = vor.u32 1.1754944e-38, %v153
    %v155 = vsel %vm152, %v154, %v150
    %v156 = vmul.f32 1.0, %v155
    %v157 = vrcp.pop %v141
    %v158 = vmul.f32 %v141, %v157
    %v159 = vsub.f32 1.0, %v158
    %v160 = vmul.f32 %v157, %v159
    %v161 = vadd.f32 %v157, %v160
    %vm162 = vweird.f32 %v141
    %vm163 = vweird.f32 %v157
    %vm164 = vmor %vm162, %vm163
    %v165 = vsel %vm164, %v157, %v161
    %v166 = vand.u32 2147483647, %v141
    %vm167 = vcmp.eq.f32.partialorder %v166, 8.507059e+37
    %v168 = vand.u32 %v141, 2147483648
    %v169 = vor.u32 1.1754944e-38, %v168
    %v170 = vsel %vm167, %v169, %v165
    %v171 = vmul.f32 1.0, %v170
    %172 = vst.msk [vmem:[#allocation2] sm:$0xff] %vm40, %v156
    %173 = vst.msk [vmem:[#allocation2 + $0x8] sm:$0xff] %vm40, %v171
    // Predicated region
    $region22: #{vbgae_forward.7} parent=1 // pred_check
      _
    $region23: #{vbgae_forward.7} parent=1 // pred_check_branch
      %175 = sbr.rel (0) target = $region25
    $region24: #{vbgae_forward.7} parent=1 // pred_region
      _
    $region25: #{vbgae_forward.7} parent=1 // pred_fallthru
      _
    // Predicated region
    $region26: #{vbgae_forward.7} parent=1 // pred_check
      _
    $region27: #{vbgae_forward.7} parent=1 // pred_check_branch
      %177 = sbr.rel (0) target = $region29
    $region28: #{vbgae_forward.7} parent=1 // pred_region
      %179 = vsyncadd [#allocation3], 0
      %s180 = sshll.u32 [#allocation2], 4
      %s181 = int_to_ptr.vmem [resolvable:$true] %s180
      %s182 = sshll.u32 %s6, 4
      %s183 = int_to_ptr.hbm [resolvable:$true] %s182
      %188 = dma.vmem_to_hbm [thread:$0]  %s181, 256, %s183, [#allocation3], 128, 128, 8
    $region29: #{vbgae_forward.7} parent=1 // pred_fallthru
      _
    // Predicated region
    $region30: #{vbgae_forward.7} parent=1 // pred_check
      _
    $region31: #{vbgae_forward.7} parent=1 // pred_check_branch
      %190 = sbr.rel (0) target = $region33
    $region32: #{vbgae_forward.7} parent=1 // pred_region
      _
    $region33: #{vbgae_forward.7} parent=1 // pred_fallthru
      _
    // Predicated region
    $region34: #{vbgae_forward.7} parent=1 // pred_check
      _
    $region35: #{vbgae_forward.7} parent=1 // pred_check_branch
      %192 = sbr.rel (0) target = $region37
    $region36: #{vbgae_forward.7} parent=1 // pred_region
      %194 = dma.done [#allocation3], 256
    $region37: #{vbgae_forward.7} parent=1 // pred_fallthru
      _
    %195 = vsyncpa [#allocation3], 1

</llo_original>
